<compile_context>
chip_gen: v5e
topology: v5e:2x2
jax: 0.10.0
libtpu: 0.0.40
codegen_flags: <defaults>
</compile_context>

<pallas_src>
import functools

import jax
import jax.numpy as jnp
from jax.experimental import pallas as pl
from jax.experimental.pallas import tpu as pltpu

LANES = 128    # lane width (fast axis)
NC = 2         # outer "parallel" grid axis (2 TensorCores on v7x; harmless on 1-TC chips)
SMOOTH = 1.0


def _round_up(x, m):
    return ((x + m - 1) // m) * m


def _soft_dice_kernel(x_ref, t_ref, part_ref, *, tm, spc, full_rows, rem, need_mask):
    """Streams (tm, 128) tiles of logits/targets, accumulating per-lane partial
    sums of p*t and p+t into the resident output block for this parallel slot.

    x_ref, t_ref : (tm, 128)     VMEM tiles (native dtype; cast to f32 here)
    part_ref     : (1, 2, 8, 128) VMEM output block: [0]=sum(p*t), [1]=sum(p+t)
    tm, spc      : static ints (tile rows, steps per parallel slot)
    full_rows    : static int, n // 128 (fully valid rows)
    rem          : static int, n % 128 (valid cols on the partial row)
    need_mask    : static bool, whether any block can touch pad/ragged data
    """
    c = pl.program_id(0)   # parallel slot (core on v7x)
    s = pl.program_id(1)   # streaming axis

    @pl.when(s == 0)
    def _():
        part_ref[...] = jnp.zeros_like(part_ref)

    def accumulate(masked):
        x = x_ref[...].astype(jnp.float32)
        t = t_ref[...].astype(jnp.float32)
        p = jax.nn.sigmoid(x)
        if masked:
            # Row-based mask (no linear-index int32 overflow). Covers explicit
            # zero-pad, the ragged final block, and overflow steps of the
            # parallel split (whose global row range is entirely invalid).
            g = c * spc + s
            row = g * tm + jax.lax.broadcasted_iota(jnp.int32, (tm, LANES), 0)
            valid = row < full_rows
            if rem:
                col = jax.lax.broadcasted_iota(jnp.int32, (tm, LANES), 1)
                valid = valid | ((row == full_rows) & (col < rem))
            # jnp.where (select) is NaN-safe: garbage in the OOB region of a
            # ragged block cannot poison the sums.
            p = jnp.where(valid, p, 0.0)
            t = jnp.where(valid, t, 0.0)
        # Fold (tm, 128) -> (8, 128): sublane-split reshape is layout-free;
        # the cross-lane reduce is deferred to the wrapper.
        pt = jnp.sum((p * t).reshape(tm // 8, 8, LANES), axis=0)
        den = jnp.sum((p + t).reshape(tm // 8, 8, LANES), axis=0)
        part_ref[0, 0] += pt
        part_ref[0, 1] += den

    if need_mask:
        g = c * spc + s
        touches_tail = (g + 1) * tm > full_rows   # scalar, cheap

        @pl.when(jnp.logical_not(touches_tail))
        def _():
            accumulate(False)      # fast steady-state path: no iota/where

        @pl.when(touches_tail)
        def _():
            accumulate(True)       # only the tail block(s) pay for the mask
    else:
        accumulate(False)          # mask compiled out entirely


def _pick_tile_budget():
    """Tier tile size / VMEM limit by detected VMEM capacity (v7x has 64 MiB)."""
    try:
        cap = pltpu.get_tpu_info().vmem_capacity_bytes
    except Exception:
        cap = 64 * (1 << 20)       # conservative fallback
    if cap >= 96 * (1 << 20):      # v5e / v6e: 128 MiB physical
        return 8192, 96 * (1 << 20)
    return 4096, 48 * (1 << 20)    # v7x (or unknown): stay well under 64 MiB


@jax.jit
def soft_dice_loss(logits, targets):
    """Pallas-backed SoftDiceLoss forward. Returns a float32 scalar."""
    n = logits.size  # static at trace time
    max_tm, vmem_limit = _pick_tile_budget()

    # Lane-dense (rows, 128) view.  Pad only to a multiple of 32 rows
    # (< 4096 elements); for 128*32-aligned volumes this is a free reshape.
    # TODO(synk): for real UNet volumes, audit this ravel/reshape in xprof and
    # arrange the producer layout so it stays a bitcast.
    rows = _round_up(pl.cdiv(n, LANES), 32)
    tm = min(max_tm, _round_up(pl.cdiv(rows, NC), 32))   # multiple of 32
    nblocks = pl.cdiv(rows, tm)
    spc = pl.cdiv(nblocks, NC)            # steps per parallel slot
    total_blocks = NC * spc
    need_mask = n < total_blocks * tm * LANES

    xf = jnp.ravel(logits)
    tf = jnp.ravel(targets)
    pad = rows * LANES - n
    if pad:
        xf = jnp.pad(xf, (0, pad))
        tf = jnp.pad(tf, (0, pad))
    x2 = xf.reshape(rows, LANES)
    t2 = tf.reshape(rows, LANES)

    if total_blocks == nblocks:
        def in_map(c, s):
            return (c * spc + s, 0)
    else:
        # Overflow steps of the parallel split re-read the last real block;
        # their contribution is masked to zero in-kernel.
        def in_map(c, s):
            return (jnp.minimum(c * spc + s, nblocks - 1), 0)

    kernel = functools.partial(
        _soft_dice_kernel,
        tm=tm, spc=spc,
        full_rows=n // LANES, rem=n % LANES,
        need_mask=need_mask,
    )

    parts = pl.pallas_call(
        kernel,
        out_shape=jax.ShapeDtypeStruct((NC, 2, 8, LANES), jnp.float32),
        grid_spec=pltpu.PrefetchScalarGridSpec(
            num_scalar_prefetch=0,
            grid=(NC, spc),
            in_specs=[
                pl.BlockSpec((tm, LANES), in_map),
                pl.BlockSpec((tm, LANES), in_map),
            ],
            out_specs=pl.BlockSpec((1, 2, 8, LANES), lambda c, s: (c, 0, 0, 0)),
        ),
        compiler_params=pltpu.CompilerParams(
            dimension_semantics=("parallel", "arbitrary"),
            vmem_limit_bytes=vmem_limit,
        ),
    )(x2, t2)

    # Tiny (NC*2*8*128 f32 = 8 KiB) final reduce + dice formula in the wrapper.
    inter = jnp.sum(parts[:, 0])
    den = jnp.sum(parts[:, 1])
    return 1.0 - (2.0 * inter + SMOOTH) / (den + SMOOTH)


def soft_dice_loss_ref(logits, targets):
    """Pure-JAX reference matching the PyTorch module."""
    smooth = 1.0
    p = jax.nn.sigmoid(logits.astype(jnp.float32)).ravel()
    t = targets.astype(jnp.float32).ravel()
    inter = jnp.sum(p * t)
    return 1.0 - (2.0 * inter + smooth) / (jnp.sum(p) + jnp.sum(t) + smooth)


if __name__ == "__main__":
    key = jax.random.PRNGKey(0)
    k1, k2, k3, k4, k5, k6 = jax.random.split(key, 6)

    # 1) Small UNet-style shapes: batch=2, channels=4, spatial=16x16 (NCHW).
    logits = jax.random.normal(k1, (2, 4, 16, 16), dtype=jnp.float32)
    targets = (jax.random.uniform(k2, (2, 4, 16, 16)) > 0.5).astype(jnp.float32)
    loss = soft_dice_loss(logits, targets)
    jax.block_until_ready(loss)
    ref = soft_dice_loss_ref(logits, targets)
    assert jnp.allclose(loss, ref, atol=1e-5, rtol=1e-5), (loss, ref)

    # 2) Odd, non-128-aligned shape to exercise the masked tail path.
    logits2 = jax.random.normal(k3, (2, 1, 17, 13), dtype=jnp.float32)
    targets2 = (jax.random.uniform(k4, (2, 1, 17, 13)) > 0.5).astype(jnp.float32)
    loss2 = soft_dice_loss(logits2, targets2)
    jax.block_until_ready(loss2)
    ref2 = soft_dice_loss_ref(logits2, targets2)
    assert jnp.allclose(loss2, ref2, atol=1e-5, rtol=1e-5), (loss2, ref2)

    # 3) 128*32-aligned shape: zero pad, mask fully compiled out, both parallel
    #    slots get a real block (exercises the pure fast path).
    logits3 = jax.random.normal(k5, (2, 4, 64, 64), dtype=jnp.bfloat16)
    targets3 = (jax.random.uniform(k6, (2, 4, 64, 64)) > 0.5).astype(jnp.bfloat16)
    loss3 = soft_dice_loss(logits3, targets3)
    jax.block_until_ready(loss3)
    ref3 = soft_dice_loss_ref(logits3, targets3)
    assert jnp.allclose(loss3, ref3, atol=1e-4, rtol=1e-4), (loss3, ref3)

    print("KERNEL_OK")
</pallas_src>

<mosaic_0001>
module attributes {stable_mosaic.version = 11 : i64} {
  func.func @_soft_dice_kernel(%arg0: i32, %arg1: i32, %arg2: memref<32x128xf32, #tpu.memory_space<vmem>>, %arg3: memref<32x128xf32, #tpu.memory_space<vmem>>, %arg4: memref<1x2x8x128xf32, #tpu.memory_space<vmem>>) attributes {dimension_semantics = [#tpu.dimension_semantics<parallel>, #tpu.dimension_semantics<arbitrary>], iteration_bounds = array<i64: 2, 1>, scalar_prefetch = 0 : i64, scratch_operands = 0 : i64, tpu.core_type = #tpu.core_type<tc>, window_params = [{transform_indices = @transform_0, window_bounds = array<i64: 32, 128>}, {transform_indices = @transform_1, window_bounds = array<i64: 32, 128>}, {transform_indices = @transform_2, window_bounds = array<i64: 1, 2, 8, 128>}]} {
    %c0_i32 = arith.constant 0 : i32
    %0 = arith.cmpi eq, %arg1, %c0_i32 : i32
    %1 = arith.extui %0 : i1 to i32
    %c0_i32_0 = arith.constant 0 : i32
    %2 = arith.cmpi ne, %1, %c0_i32_0 : i32
    scf.if %2 {
      %cst = arith.constant 0.000000e+00 : f32
      %13 = vector.broadcast %cst : f32 to vector<1x2x8x128xf32>
      %c0 = arith.constant 0 : index
      %c0_4 = arith.constant 0 : index
      %c0_5 = arith.constant 0 : index
      %c0_6 = arith.constant 0 : index
      %14 = vector.load %arg4[%c0, %c0_4, %c0_5, %c0_6] : memref<1x2x8x128xf32, #tpu.memory_space<vmem>>, vector<1x2x8x128xf32>
      tpu.vector_store %arg4[%c0, %c0_4, %c0_5, %c0_6], %13 {strides = array<i32>} : memref<1x2x8x128xf32, #tpu.memory_space<vmem>>, vector<1x2x8x128xf32>,
    } else {
    }
    %c1_i32 = arith.constant 1 : i32
    %3 = arith.muli %arg0, %c1_i32 : i32
    %4 = arith.addi %3, %arg1 : i32
    %c1_i32_1 = arith.constant 1 : i32
    %5 = arith.addi %4, %c1_i32_1 : i32
    %c32_i32 = arith.constant 32 : i32
    %6 = arith.muli %5, %c32_i32 : i32
    %c16_i32 = arith.constant 16 : i32
    %7 = arith.cmpi sgt, %6, %c16_i32 : i32
    %true = arith.constant true
    %8 = arith.xori %7, %true : i1
    %9 = arith.extui %8 : i1 to i32
    %c0_i32_2 = arith.constant 0 : i32
    %10 = arith.cmpi ne, %9, %c0_i32_2 : i32
    scf.if %10 {
      %c0 = arith.constant 0 : index
      %c0_4 = arith.constant 0 : index
      %13 = vector.load %arg2[%c0, %c0_4] : memref<32x128xf32, #tpu.memory_space<vmem>>, vector<32x128xf32>
      %c0_5 = arith.constant 0 : index
      %c0_6 = arith.constant 0 : index
      %14 = vector.load %arg3[%c0_5, %c0_6] : memref<32x128xf32, #tpu.memory_space<vmem>>, vector<32x128xf32>
      %15 = arith.negf %13 : vector<32x128xf32>
      %16 = math.exp %15 : vector<32x128xf32>
      %cst = arith.constant 1.000000e+00 : f32
      %17 = vector.broadcast %cst : f32 to vector<32x128xf32>
      %18 = arith.addf %17, %16 : vector<32x128xf32>
      %19 = arith.divf %17, %18 : vector<32x128xf32>
      %20 = arith.mulf %19, %14 : vector<32x128xf32>
      %21 = vector.shape_cast %20 : vector<32x128xf32> to vector<4x8x128xf32>
      %cst_7 = arith.constant dense<0.000000e+00> : vector<8x128xf32>
      %22 = vector.multi_reduction <add>, %21, %cst_7 [0] : vector<4x8x128xf32> to vector<8x128xf32>
      %23 = arith.addf %19, %14 : vector<32x128xf32>
      %24 = vector.shape_cast %23 : vector<32x128xf32> to vector<4x8x128xf32>
      %cst_8 = arith.constant dense<0.000000e+00> : vector<8x128xf32>
      %25 = vector.multi_reduction <add>, %24, %cst_8 [0] : vector<4x8x128xf32> to vector<8x128xf32>
      %c0_9 = arith.constant 0 : index
      %c0_10 = arith.constant 0 : index
      %c0_11 = arith.constant 0 : index
      %c0_12 = arith.constant 0 : index
      %26 = vector.load %arg4[%c0_9, %c0_10, %c0_11, %c0_12] : memref<1x2x8x128xf32, #tpu.memory_space<vmem>>, vector<1x1x8x128xf32>
      %27 = vector.shape_cast %26 : vector<1x1x8x128xf32> to vector<8x128xf32>
      %28 = arith.addf %27, %22 : vector<8x128xf32>
      %c0_13 = arith.constant 0 : index
      %c0_14 = arith.constant 0 : index
      %c0_15 = arith.constant 0 : index
      %c0_16 = arith.constant 0 : index
      %29 = vector.load %arg4[%c0_13, %c0_14, %c0_15, %c0_16] : memref<1x2x8x128xf32, #tpu.memory_space<vmem>>, vector<1x1x8x128xf32>
      %30 = vector.shape_cast %29 : vector<1x1x8x128xf32> to vector<8x128xf32>
      %31 = vector.shape_cast %28 : vector<8x128xf32> to vector<1x1x8x128xf32>
      tpu.vector_store %arg4[%c0_13, %c0_14, %c0_15, %c0_16], %31 {strides = array<i32>} : memref<1x2x8x128xf32, #tpu.memory_space<vmem>>, vector<1x1x8x128xf32>,
      %c0_17 = arith.constant 0 : index
      %c1 = arith.constant 1 : index
      %c0_18 = arith.constant 0 : index
      %c0_19 = arith.constant 0 : index
      %32 = vector.load %arg4[%c0_17, %c1, %c0_18, %c0_19] : memref<1x2x8x128xf32, #tpu.memory_space<vmem>>, vector<1x1x8x128xf32>
      %33 = vector.shape_cast %32 : vector<1x1x8x128xf32> to vector<8x128xf32>
      %34 = arith.addf %33, %25 : vector<8x128xf32>
      %c0_20 = arith.constant 0 : index
      %c1_21 = arith.constant 1 : index
      %c0_22 = arith.constant 0 : index
      %c0_23 = arith.constant 0 : index
      %35 = vector.load %arg4[%c0_20, %c1_21, %c0_22, %c0_23] : memref<1x2x8x128xf32, #tpu.memory_space<vmem>>, vector<1x1x8x128xf32>
      %36 = vector.shape_cast %35 : vector<1x1x8x128xf32> to vector<8x128xf32>
      %37 = vector.shape_cast %34 : vector<8x128xf32> to vector<1x1x8x128xf32>
      tpu.vector_store %arg4[%c0_20, %c1_21, %c0_22, %c0_23], %37 {strides = array<i32>} : memref<1x2x8x128xf32, #tpu.memory_space<vmem>>, vector<1x1x8x128xf32>,
    } else {
    }
    %11 = arith.extui %7 : i1 to i32
    %c0_i32_3 = arith.constant 0 : i32
    %12 = arith.cmpi ne, %11, %c0_i32_3 : i32
    scf.if %12 {
      %c0 = arith.constant 0 : index
      %c0_4 = arith.constant 0 : index
      %13 = vector.load %arg2[%c0, %c0_4] : memref<32x128xf32, #tpu.memory_space<vmem>>, vector<32x128xf32>
      %c0_5 = arith.constant 0 : index
      %c0_6 = arith.constant 0 : index
      %14 = vector.load %arg3[%c0_5, %c0_6] : memref<32x128xf32, #tpu.memory_space<vmem>>, vector<32x128xf32>
      %15 = arith.negf %13 : vector<32x128xf32>
      %16 = math.exp %15 : vector<32x128xf32>
      %cst = arith.constant 1.000000e+00 : f32
      %17 = vector.broadcast %cst : f32 to vector<32x128xf32>
      %18 = arith.addf %17, %16 : vector<32x128xf32>
      %19 = arith.divf %17, %18 : vector<32x128xf32>
      %c1_i32_7 = arith.constant 1 : i32
      %20 = arith.muli %arg0, %c1_i32_7 : i32
      %21 = arith.addi %20, %arg1 : i32
      %c32_i32_8 = arith.constant 32 : i32
      %22 = arith.muli %21, %c32_i32_8 : i32
      %23 = tpu.iota {dimensions = array<i32: 0>} : vector<32x128xi32>
      %24 = vector.broadcast %22 : i32 to vector<32x128xi32>
      %25 = arith.addi %24, %23 : vector<32x128xi32>
      %c16_i32_9 = arith.constant 16 : i32
      %26 = vector.broadcast %c16_i32_9 : i32 to vector<32x128xi32>
      %27 = arith.cmpi slt, %25, %26 : vector<32x128xi32>
      %cst_10 = arith.constant 0.000000e+00 : f32
      %28 = vector.broadcast %cst_10 : f32 to vector<32x128xf32>
      %29 = arith.select %27, %19, %28 : vector<32x128xi1>, vector<32x128xf32>
      %cst_11 = arith.constant 0.000000e+00 : f32
      %30 = vector.broadcast %cst_11 : f32 to vector<32x128xf32>
      %31 = arith.select %27, %14, %30 : vector<32x128xi1>, vector<32x128xf32>
      %32 = arith.mulf %29, %31 : vector<32x128xf32>
      %33 = vector.shape_cast %32 : vector<32x128xf32> to vector<4x8x128xf32>
      %cst_12 = arith.constant dense<0.000000e+00> : vector<8x128xf32>
      %34 = vector.multi_reduction <add>, %33, %cst_12 [0] : vector<4x8x128xf32> to vector<8x128xf32>
      %35 = arith.addf %29, %31 : vector<32x128xf32>
      %36 = vector.shape_cast %35 : vector<32x128xf32> to vector<4x8x128xf32>
      %cst_13 = arith.constant dense<0.000000e+00> : vector<8x128xf32>
      %37 = vector.multi_reduction <add>, %36, %cst_13 [0] : vector<4x8x128xf32> to vector<8x128xf32>
      %c0_14 = arith.constant 0 : index
      %c0_15 = arith.constant 0 : index
      %c0_16 = arith.constant 0 : index
      %c0_17 = arith.constant 0 : index
      %38 = vector.load %arg4[%c0_14, %c0_15, %c0_16, %c0_17] : memref<1x2x8x128xf32, #tpu.memory_space<vmem>>, vector<1x1x8x128xf32>
      %39 = vector.shape_cast %38 : vector<1x1x8x128xf32> to vector<8x128xf32>
      %40 = arith.addf %39, %34 : vector<8x128xf32>
      %c0_18 = arith.constant 0 : index
      %c0_19 = arith.constant 0 : index
      %c0_20 = arith.constant 0 : index
      %c0_21 = arith.constant 0 : index
      %41 = vector.load %arg4[%c0_18, %c0_19, %c0_20, %c0_21] : memref<1x2x8x128xf32, #tpu.memory_space<vmem>>, vector<1x1x8x128xf32>
      %42 = vector.shape_cast %41 : vector<1x1x8x128xf32> to vector<8x128xf32>
      %43 = vector.shape_cast %40 : vector<8x128xf32> to vector<1x1x8x128xf32>
      tpu.vector_store %arg4[%c0_18, %c0_19, %c0_20, %c0_21], %43 {strides = array<i32>} : memref<1x2x8x128xf32, #tpu.memory_space<vmem>>, vector<1x1x8x128xf32>,
      %c0_22 = arith.constant 0 : index
      %c1 = arith.constant 1 : index
      %c0_23 = arith.constant 0 : index
      %c0_24 = arith.constant 0 : index
      %44 = vector.load %arg4[%c0_22, %c1, %c0_23, %c0_24] : memref<1x2x8x128xf32, #tpu.memory_space<vmem>>, vector<1x1x8x128xf32>
      %45 = vector.shape_cast %44 : vector<1x1x8x128xf32> to vector<8x128xf32>
      %46 = arith.addf %45, %37 : vector<8x128xf32>
      %c0_25 = arith.constant 0 : index
      %c1_26 = arith.constant 1 : index
      %c0_27 = arith.constant 0 : index
      %c0_28 = arith.constant 0 : index
      %47 = vector.load %arg4[%c0_25, %c1_26, %c0_27, %c0_28] : memref<1x2x8x128xf32, #tpu.memory_space<vmem>>, vector<1x1x8x128xf32>
      %48 = vector.shape_cast %47 : vector<1x1x8x128xf32> to vector<8x128xf32>
      %49 = vector.shape_cast %46 : vector<8x128xf32> to vector<1x1x8x128xf32>
      tpu.vector_store %arg4[%c0_25, %c1_26, %c0_27, %c0_28], %49 {strides = array<i32>} : memref<1x2x8x128xf32, #tpu.memory_space<vmem>>, vector<1x1x8x128xf32>,
    } else {
    }
    return
  }
  func.func @transform_0(%arg0: i32, %arg1: i32) -> (i32, i32) {
    %c1_i32 = arith.constant 1 : i32
    %0 = arith.muli %arg0, %c1_i32 : i32
    %1 = arith.addi %0, %arg1 : i32
    %c0_i32 = arith.constant 0 : i32
    %2 = arith.minsi %1, %c0_i32 : i32
    %c0_i32_0 = arith.constant 0 : i32
    %c0_i32_1 = arith.constant 0 : i32
    return %2, %c0_i32_0 : i32, i32
  }
  func.func @transform_1(%arg0: i32, %arg1: i32) -> (i32, i32) {
    %c1_i32 = arith.constant 1 : i32
    %0 = arith.muli %arg0, %c1_i32 : i32
    %1 = arith.addi %0, %arg1 : i32
    %c0_i32 = arith.constant 0 : i32
    %2 = arith.minsi %1, %c0_i32 : i32
    %c0_i32_0 = arith.constant 0 : i32
    %c0_i32_1 = arith.constant 0 : i32
    return %2, %c0_i32_0 : i32, i32
  }
  func.func @transform_2(%arg0: i32, %arg1: i32) -> (i32, i32, i32, i32) {
    %c0_i32 = arith.constant 0 : i32
    %c0_i32_0 = arith.constant 0 : i32
    %c0_i32_1 = arith.constant 0 : i32
    %c0_i32_2 = arith.constant 0 : i32
    return %arg0, %c0_i32, %c0_i32_0, %c0_i32_1 : i32, i32, i32, i32
  }
}

</mosaic_0001>

<llo_original>
// kernel: soft_dice_loss.1
$region0: #{soft_dice_loss.1}
  #allocation0 [shape = 'u32[]', space=smem, size = 0x4, offset = 0x4, fixed_abs, tag = 'smem constant byte address 0x4 - core index']
  #allocation1 [shape = 'u32[72,128]{1,0:T(1,128)}', space=vmem, size = 0x9000, scoped, tag = 'internal scratch']
  %s0 = inlined_call_operand.vmem [shape: f32[32,128], index: 0, kind: input, shape index: {}]
  %s1 = inlined_call_operand.vmem [shape: f32[32,128], index: 1, kind: input, shape index: {}]
  %s2 = inlined_call_operand.vmem [shape: f32[2,2,8,128], index: 2, kind: output, shape index: {}]
  %s3 = sld [smem:[#allocation0]]
  $region53: #{soft_dice_loss.1} parent=0
    _
  %s5 = ssub.s32 1, %s3
  %s6 = scalar_select 0, %s5, %s3
  loop: start=0, step=1, limit=4
  $region2: #{soft_dice_loss.1} parent=0 // loop_pre_header
    _
  $region3: #{soft_dice_loss.1} parent=0 // loop_header
    %s8 = sphi 0, %s12
    %p9 = scmp.ge.s32.totalorder %s8, 4
    %s15 = sphi 0, %s27
    %s16 = sphi 0, %s23
    %s17 = sphi 0, %s15
    %s18 = sphi 0, %s16
    %s19 = sphi 0, %s17
    %s20 = sphi 0, %s18
    %s36 = sphi 0, %s38
    %s39 = sphi 0, %s36
    %s40 = sphi 0, %s39
    %s56 = sphi 0, %s40
    %s68 = sphi 0, %s70
    %s71 = sphi 0, %s68
    %s72 = sphi 0, %s71
    %s88 = sphi 0, %s72
    %s94 = sphi 0, %s96
    %s97 = sphi 0, %s94
    %s98 = sphi 0, %s97
    %s114 = sphi 0, %s98
  $region4: #{soft_dice_loss.1} parent=0 // loop_header_branch
    %11 = sbr.rel (%p9) target = $region8
  $region5: #{soft_dice_loss.1} parent=0 // loop_body
    %s13 = ssub.s32 %s8, 1
    %s14 = ssub.s32 %s8, 2
    %s21 = sadd.s32 1, %s16
    %p22 = scmp.ge.s32.totalorder %s21, 1
    %s23 = scalar_select %p22, 0, %s21
    %s24 = sadd.s32 1, %s15
    %s25 = scalar_select %p22, %s24, %s15
    %p26 = scmp.ge.s32.totalorder %s25, 2
    %s27 = scalar_select %p26, 0, %s25
    %s28 = sadd.s32 %s15, %s16
    %p29 = scmp.lt.s32.totalorder %s28, 0
    %s30 = scalar_select %p29, %s28, 0
    %s31 = sadd.s32 %s27, %s23
    %p32 = scmp.lt.s32.totalorder %s31, 0
    %s33 = scalar_select %p32, %s31, 0
    %s34 = ssub.s32 %s30, %s33
    %p35 = scmp.eq.s32.totalorder %s34, 0
    %s37 = sadd.s32 %s36, 1
    %s38 = scalar_select %p35, %s36, %s37
    %p41 = pneg %p35
    %p42 = scmp.eq.s32.totalorder %s8, 1
    %p43 = por %p41, %p42
    %p44 = scmp.ne.s32.totalorder %s36, %s39
    %p45 = scmp.eq.s32.totalorder %s8, 0
    %p46 = por %p44, %p45
    %p47 = scmp.ne.s32.totalorder %s36, %s39
    %p48 = scmp.eq.s32.totalorder %s13, 1
    %p49 = por %p47, %p48
    %p50 = scmp.ne.s32.totalorder %s39, %s40
    %p51 = scmp.eq.s32.totalorder %s13, 0
    %p52 = por %p50, %p51
    %p53 = scmp.ne.s32.totalorder %s39, %s40
    %p54 = scmp.eq.s32.totalorder %s14, 1
    %p55 = por %p53, %p54
    %p57 = scmp.ne.s32.totalorder %s40, %s56
    %p58 = scmp.eq.s32.totalorder %s14, 0
    %p59 = por %p57, %p58
    %s60 = sadd.s32 %s15, %s16
    %p61 = scmp.lt.s32.totalorder %s60, 0
    %s62 = scalar_select %p61, %s60, 0
    %s63 = sadd.s32 %s27, %s23
    %p64 = scmp.lt.s32.totalorder %s63, 0
    %s65 = scalar_select %p64, %s63, 0
    %s66 = ssub.s32 %s62, %s65
    %p67 = scmp.eq.s32.totalorder %s66, 0
    %s69 = sadd.s32 %s68, 1
    %s70 = scalar_select %p67, %s68, %s69
    %p73 = pneg %p67
    %p74 = scmp.eq.s32.totalorder %s8, 1
    %p75 = por %p73, %p74
    %p76 = scmp.ne.s32.totalorder %s68, %s71
    %p77 = scmp.eq.s32.totalorder %s8, 0
    %p78 = por %p76, %p77
    %p79 = scmp.ne.s32.totalorder %s68, %s71
    %p80 = scmp.eq.s32.totalorder %s13, 1
    %p81 = por %p79, %p80
    %p82 = scmp.ne.s32.totalorder %s71, %s72
    %p83 = scmp.eq.s32.totalorder %s13, 0
    %p84 = por %p82, %p83
    %p85 = scmp.ne.s32.totalorder %s71, %s72
    %p86 = scmp.eq.s32.totalorder %s14, 1
    %p87 = por %p85, %p86
    %p89 = scmp.ne.s32.totalorder %s72, %s88
    %p90 = scmp.eq.s32.totalorder %s14, 0
    %p91 = por %p89, %p90
    %s92 = ssub.s32 %s15, %s27
    %p93 = scmp.eq.s32.totalorder %s92, 0
    %s95 = sadd.s32 %s94, 1
    %s96 = scalar_select %p93, %s94, %s95
    %p99 = pneg %p93
    %p100 = scmp.eq.s32.totalorder %s8, 1
    %p101 = por %p99, %p100
    %p102 = scmp.ne.s32.totalorder %s94, %s97
    %p103 = scmp.eq.s32.totalorder %s8, 0
    %p104 = por %p102, %p103
    %p105 = scmp.ne.s32.totalorder %s94, %s97
    %p106 = scmp.eq.s32.totalorder %s13, 1
    %p107 = por %p105, %p106
    %p108 = scmp.ne.s32.totalorder %s97, %s98
    %p109 = scmp.eq.s32.totalorder %s13, 0
    %p110 = por %p108, %p109
    %p111 = scmp.ne.s32.totalorder %s97, %s98
    %p112 = scmp.eq.s32.totalorder %s14, 1
    %p113 = por %p111, %p112
    %p115 = scmp.ne.s32.totalorder %s98, %s114
    %p116 = scmp.eq.s32.totalorder %s14, 0
    %p117 = por %p115, %p116
    %p118 = scmp.le.s32.totalorder 1, %s8
    %p119 = scmp.lt.s32.totalorder %s8, 3
    %p120 = pnand %p118, %p119
    %p121 = pneg %p120
    // Predicated region
    $region9: #{soft_dice_loss.1} parent=5 // pred_check
      _
    $region10: #{soft_dice_loss.1} parent=5 // pred_check_branch
      %123 = sbr.rel (%p120) target = $region12
    $region11: #{soft_dice_loss.1} parent=5 // pred_region
      %s124 = ssub.s32 %s8, 1
    $region12: #{soft_dice_loss.1} parent=5 // pred_fallthru
      _
    %p125 = scmp.lt.s32.totalorder %s8, 2
    // Predicated region
    $region13: #{soft_dice_loss.1} parent=5 // pred_check
      %p126 = pneg %p125
    $region14: #{soft_dice_loss.1} parent=5 // pred_check_branch
      %128 = sbr.rel (%p126) target = $region16
    $region15: #{soft_dice_loss.1} parent=5 // pred_region
      // Predicated region
      $region17: #{soft_dice_loss.1} parent=15 // pred_check
        %p129 = pneg %p46
      $region18: #{soft_dice_loss.1} parent=15 // pred_check_branch
        %131 = sbr.rel (%p129) target = $region20
      $region19: #{soft_dice_loss.1} parent=15 // pred_region
        %s132 = sadd.s32 %s15, %s16
        %p133 = scmp.lt.s32.totalorder %s132, 0
        %s134 = scalar_select %p133, %s132, 0
        %s135 = smul.u32 4, %s134
        %p136 = scmp.lt.s32.totalorder %s135, 3
        %s137 = scalar_select %p136, %s135, 3
        %s138 = smul.addr %s137, 8
        %s139 = scalar_lea.vmem %s0, %s138
        %s140 = sadd.s32 %s15, %s16
        %p141 = scmp.lt.s32.totalorder %s140, 0
        %s142 = scalar_select %p141, %s140, 0
        %s143 = smul.u32 4, %s142
      $region20: #{soft_dice_loss.1} parent=15 // pred_fallthru
        _
      // Predicated region
      $region21: #{soft_dice_loss.1} parent=15 // pred_check
        %p144 = pneg %p78
      $region22: #{soft_dice_loss.1} parent=15 // pred_check_branch
        %146 = sbr.rel (%p144) target = $region24
      $region23: #{soft_dice_loss.1} parent=15 // pred_region
        %s147 = sadd.s32 %s15, %s16
        %p148 = scmp.lt.s32.totalorder %s147, 0
        %s149 = scalar_select %p148, %s147, 0
        %s150 = smul.u32 4, %s149
        %p151 = scmp.lt.s32.totalorder %s150, 3
        %s152 = scalar_select %p151, %s150, 3
        %s153 = smul.addr %s152, 8
        %s154 = scalar_lea.vmem %s1, %s153
        %s155 = sadd.s32 %s15, %s16
        %p156 = scmp.lt.s32.totalorder %s155, 0
        %s157 = scalar_select %p156, %s155, 0
        %s158 = smul.u32 4, %s157
      $region24: #{soft_dice_loss.1} parent=15 // pred_fallthru
        _
    $region16: #{soft_dice_loss.1} parent=5 // pred_fallthru
      _
    %p159 = scmp.le.s32.totalorder 1, %s8
    %p160 = scmp.lt.s32.totalorder %s8, 3
    %p161 = pnand %p159, %p160
    %p162 = pneg %p161
    // Predicated region
    $region25: #{soft_dice_loss.1} parent=5 // pred_check
      _
    $region26: #{soft_dice_loss.1} parent=5 // pred_check_branch
      %164 = sbr.rel (%p161) target = $region28
    $region27: #{soft_dice_loss.1} parent=5 // pred_region
      %s165 = ssub.s32 %s8, 1
      %s166 = sadd.s32 %s17, %s18
      %p167 = scmp.lt.s32.totalorder %s166, 0
      %s168 = scalar_select %p167, %s166, 0
      %s169 = smul.u32 4, %s168
      %p170 = scmp.lt.s32.totalorder %s169, 3
      %s171 = scalar_select %p170, %s169, 3
      %s172 = smul.addr %s171, 8
      %s173 = scalar_lea.vmem %s0, %s172
      %p174 = pneg %p52
      %p175 = pneg %p49
      %s176 = sadd.s32 %s17, %s18
      %p177 = scmp.lt.s32.totalorder %s176, 0
      %s178 = scalar_select %p177, %s176, 0
      %s179 = smul.u32 4, %s178
      %p180 = scmp.lt.s32.totalorder %s179, 3
      %s181 = scalar_select %p180, %s179, 3
      %s182 = smul.addr %s181, 8
      %s183 = scalar_lea.vmem %s1, %s182
      %p184 = pneg %p84
      %p185 = pneg %p81
      %p186 = pneg %p110
      %p187 = pneg %p107
      %p188 = scmp.lt.s32.totalorder %s17, 1
      %s189 = scalar_select %p188, %s17, 1
      %s190 = smul.addr %s189, 2
      %s191 = smul.addr %s190, 8
      %s192 = scalar_lea.vmem %s2, %s191
      %s193 = sadd.s32 %s17, %s18
      %p194 = scmp.lt.s32.totalorder %s193, 0
      %s195 = scalar_select %p194, %s193, 0
      %s196 = smul.u32 4, %s195
      %p197 = scmp.lt.s32.totalorder %s196, 3
      %s198 = scalar_select %p197, %s196, 3
      %s199 = smul.addr %s198, 8
      %s200 = scalar_lea.vmem %s0, %s199
      %s201 = sadd.s32 %s17, %s18
      %p202 = scmp.lt.s32.totalorder %s201, 0
      %s203 = scalar_select %p202, %s201, 0
      %s204 = smul.u32 4, %s203
      %s205 = sadd.s32 %s17, %s18
      %p206 = scmp.lt.s32.totalorder %s205, 0
      %s207 = scalar_select %p206, %s205, 0
      %s208 = smul.u32 4, %s207
      %p209 = scmp.lt.s32.totalorder %s208, 3
      %s210 = scalar_select %p209, %s208, 3
      %s211 = smul.addr %s210, 8
      %s212 = scalar_lea.vmem %s1, %s211
      %s213 = sadd.s32 %s17, %s18
      %p214 = scmp.lt.s32.totalorder %s213, 0
      %s215 = scalar_select %p214, %s213, 0
      %s216 = smul.u32 4, %s215
      %p217 = scmp.lt.s32.totalorder %s17, 1
      %s218 = scalar_select %p217, %s17, 1
      %s219 = smul.addr %s218, 2
      %s220 = smul.addr %s219, 8
      %s221 = scalar_lea.vmem %s2, %s220
      %p222 = scmp.eq.s32.totalorder %s18, 0
      // Predicated region
      $region29: #{soft_dice_loss.1} parent=27 // pred_check
        %p223 = pneg %p222
      $region30: #{soft_dice_loss.1} parent=27 // pred_check_branch
        %225 = sbr.rel (%p223) target = $region32
      $region31: #{soft_dice_loss.1} parent=27 // pred_region
        %226 = vst [vmem:[%s221] sm:$0xff] 0.0
        %227 = vst [vmem:[%s221 + $0x8] sm:$0xff] 0.0
      $region32: #{soft_dice_loss.1} parent=27 // pred_fallthru
        _
      %s228 = sadd.s32 %s17, %s18
      %s229 = sadd.s32 %s228, 1
      %s230 = smul.u32 %s229, 32
      %p231 = scmp.gt.s32.totalorder %s230, 16
      %p232 = scmp.le.s32.totalorder %s230, 16
      // Predicated region
      $region33: #{soft_dice_loss.1} parent=27 // pred_check
        %p233 = pneg %p232
      $region34: #{soft_dice_loss.1} parent=27 // pred_check_branch
        %235 = sbr.rel (%p233) target = $region36
      $region35: #{soft_dice_loss.1} parent=27 // pred_region
        %v236 = vld [vmem:[%s200] sm:$0xff]
        %v237 = vld [vmem:[%s200 + $0x8] sm:$0xff]
        %v238 = vld [vmem:[%s200 + $0x10] sm:$0xff]
        %v239 = vld [vmem:[%s200 + $0x18] sm:$0xff]
        %v240 = vld [vmem:[%s212] sm:$0xff]
        %v241 = vld [vmem:[%s212 + $0x8] sm:$0xff]
        %v242 = vld [vmem:[%s212 + $0x10] sm:$0xff]
        %v243 = vld [vmem:[%s212 + $0x18] sm:$0xff]
        %v244 = vxor.u32 %v236, 2147483648
        %v245 = vxor.u32 %v237, 2147483648
        %v246 = vxor.u32 %v238, 2147483648
        %v247 = vxor.u32 %v239, 2147483648
        %v248 = vmul.f32 %v244, 1.442695
        %v249 = vpow.pop %v248
        %v250 = vmul.f32 %v245, 1.442695
        %v251 = vpow.pop %v250
        %v252 = vmul.f32 %v246, 1.442695
        %v253 = vpow.pop %v252
        %v254 = vmul.f32 %v247, 1.442695
        %v255 = vpow.pop %v254
        %v256 = vadd.f32 %v249, 1.0
        %v257 = vadd.f32 %v251, 1.0
        %v258 = vadd.f32 %v253, 1.0
        %v259 = vadd.f32 %v255, 1.0
        %v260 = vrcp.pop %v256
        %v261 = vmul.f32 %v256, %v260
        %v262 = vsub.f32 1.0, %v261
        %v263 = vmul.f32 %v260, %v262
        %v264 = vadd.f32 %v260, %v263
        %vm265 = vweird.f32 %v256
        %vm266 = vweird.f32 %v260
        %vm267 = vmor %vm265, %vm266
        %v268 = vsel %vm267, %v260, %v264
        %v269 = vand.u32 2147483647, %v256
        %vm270 = vcmp.eq.f32.partialorder %v269, 8.507059e+37
        %v271 = vand.u32 %v256, 2147483648
        %v272 = vor.u32 1.1754944e-38, %v271
        %v273 = vsel %vm270, %v272, %v268
        %v274 = vmul.f32 1.0, %v273
        %v275 = vrcp.pop %v257
        %v276 = vmul.f32 %v257, %v275
        %v277 = vsub.f32 1.0, %v276
        %v278 = vmul.f32 %v275, %v277
        %v279 = vadd.f32 %v275, %v278
        %vm280 = vweird.f32 %v257
        %vm281 = vweird.f32 %v275
        %vm282 = vmor %vm280, %vm281
        %v283 = vsel %vm282, %v275, %v279
        %v284 = vand.u32 2147483647, %v257
        %vm285 = vcmp.eq.f32.partialorder %v284, 8.507059e+37
        %v286 = vand.u32 %v257, 2147483648
        %v287 = vor.u32 1.1754944e-38, %v286
        %v288 = vsel %vm285, %v287, %v283
        %v289 = vmul.f32 1.0, %v288
        %v290 = vrcp.pop %v258
        %v291 = vmul.f32 %v258, %v290
        %v292 = vsub.f32 1.0, %v291
        %v293 = vmul.f32 %v290, %v292
        %v294 = vadd.f32 %v290, %v293
        %vm295 = vweird.f32 %v258
        %vm296 = vweird.f32 %v290
        %vm297 = vmor %vm295, %vm296
        %v298 = vsel %vm297, %v290, %v294
        %v299 = vand.u32 2147483647, %v258
        %vm300 = vcmp.eq.f32.partialorder %v299, 8.507059e+37
        %v301 = vand.u32 %v258, 2147483648
        %v302 = vor.u32 1.1754944e-38, %v301
        %v303 = vsel %vm300, %v302, %v298
        %v304 = vmul.f32 1.0, %v303
        %v305 = vrcp.pop %v259
        %v306 = vmul.f32 %v259, %v305
        %v307 = vsub.f32 1.0, %v306
        %v308 = vmul.f32 %v305, %v307
        %v309 = vadd.f32 %v305, %v308
        %vm310 = vweird.f32 %v259
        %vm311 = vweird.f32 %v305
        %vm312 = vmor %vm310, %vm311
        %v313 = vsel %vm312, %v305, %v309
        %v314 = vand.u32 2147483647, %v259
        %vm315 = vcmp.eq.f32.partialorder %v314, 8.507059e+37
        %v316 = vand.u32 %v259, 2147483648
        %v317 = vor.u32 1.1754944e-38, %v316
        %v318 = vsel %vm315, %v317, %v313
        %v319 = vmul.f32 1.0, %v318
        %v320 = vmul.f32 %v274, %v240
        %v321 = vmul.f32 %v289, %v241
        %v322 = vmul.f32 %v304, %v242
        %v323 = vmul.f32 %v319, %v243
        %v324 = vadd.f32 %v320, %v321
        %v325 = vadd.f32 %v324, %v322
        %v326 = vadd.f32 %v325, %v323
        %v327 = vadd.f32 %v274, %v240
        %v328 = vadd.f32 %v289, %v241
        %v329 = vadd.f32 %v304, %v242
        %v330 = vadd.f32 %v319, %v243
        %v331 = vadd.f32 %v327, %v328
        %v332 = vadd.f32 %v331, %v329
        %v333 = vadd.f32 %v332, %v330
        %v334 = vld [vmem:[%s221] sm:$0xff]
        %v335 = vadd.f32 %v334, %v326
        %336 = vst [vmem:[%s221] sm:$0xff] %v335
        %s337 = scalar_lea.vmem %s221, 8
        %v338 = vld [vmem:[%s337] sm:$0xff]
        %v339 = vadd.f32 %v338, %v333
        %340 = vst [vmem:[%s337] sm:$0xff] %v339
      $region36: #{soft_dice_loss.1} parent=27 // pred_fallthru
        _
      // Predicated region
      $region37: #{soft_dice_loss.1} parent=27 // pred_check
        %p341 = pneg %p231
      $region38: #{soft_dice_loss.1} parent=27 // pred_check_branch
        %343 = sbr.rel (%p341) target = $region40
      $region39: #{soft_dice_loss.1} parent=27 // pred_region
        %v344 = vld [vmem:[%s200] sm:$0xff]
        %v345 = vld [vmem:[%s200 + $0x8] sm:$0xff]
        %v346 = vld [vmem:[%s200 + $0x10] sm:$0xff]
        %v347 = vld [vmem:[%s200 + $0x18] sm:$0xff]
        %v348 = vld [vmem:[%s212] sm:$0xff]
        %v349 = vld [vmem:[%s212 + $0x8] sm:$0xff]
        %v350 = vld [vmem:[%s212 + $0x10] sm:$0xff]
        %v351 = vld [vmem:[%s212 + $0x18] sm:$0xff]
        %v352 = vxor.u32 %v344, 2147483648
        %v353 = vxor.u32 %v345, 2147483648
        %v354 = vxor.u32 %v346, 2147483648
        %v355 = vxor.u32 %v347, 2147483648
        %v356 = vmul.f32 %v352, 1.442695
        %v357 = vpow.pop %v356
        %v358 = vmul.f32 %v353, 1.442695
        %v359 = vpow.pop %v358
        %v360 = vmul.f32 %v354, 1.442695
        %v361 = vpow.pop %v360
        %v362 = vmul.f32 %v355, 1.442695
        %v363 = vpow.pop %v362
        %v364 = vadd.f32 %v357, 1.0
        %v365 = vadd.f32 %v359, 1.0
        %v366 = vadd.f32 %v361, 1.0
        %v367 = vadd.f32 %v363, 1.0
        %v368 = vrcp.pop %v364
        %v369 = vmul.f32 %v364, %v368
        %v370 = vsub.f32 1.0, %v369
        %v371 = vmul.f32 %v368, %v370
        %v372 = vadd.f32 %v368, %v371
        %vm373 = vweird.f32 %v364
        %vm374 = vweird.f32 %v368
        %vm375 = vmor %vm373, %vm374
        %v376 = vsel %vm375, %v368, %v372
        %v377 = vand.u32 2147483647, %v364
        %vm378 = vcmp.eq.f32.partialorder %v377, 8.507059e+37
        %v379 = vand.u32 %v364, 2147483648
        %v380 = vor.u32 1.1754944e-38, %v379
        %v381 = vsel %vm378, %v380, %v376
        %v382 = vmul.f32 1.0, %v381
        %v383 = vrcp.pop %v365
        %v384 = vmul.f32 %v365, %v383
        %v385 = vsub.f32 1.0, %v384
        %v386 = vmul.f32 %v383, %v385
        %v387 = vadd.f32 %v383, %v386
        %vm388 = vweird.f32 %v365
        %vm389 = vweird.f32 %v383
        %vm390 = vmor %vm388, %vm389
        %v391 = vsel %vm390, %v383, %v387
        %v392 = vand.u32 2147483647, %v365
        %vm393 = vcmp.eq.f32.partialorder %v392, 8.507059e+37
        %v394 = vand.u32 %v365, 2147483648
        %v395 = vor.u32 1.1754944e-38, %v394
        %v396 = vsel %vm393, %v395, %v391
        %v397 = vmul.f32 1.0, %v396
        %v398 = vrcp.pop %v366
        %v399 = vmul.f32 %v366, %v398
        %v400 = vsub.f32 1.0, %v399
        %v401 = vmul.f32 %v398, %v400
        %v402 = vadd.f32 %v398, %v401
        %vm403 = vweird.f32 %v366
        %vm404 = vweird.f32 %v398
        %vm405 = vmor %vm403, %vm404
        %v406 = vsel %vm405, %v398, %v402
        %v407 = vand.u32 2147483647, %v366
        %vm408 = vcmp.eq.f32.partialorder %v407, 8.507059e+37
        %v409 = vand.u32 %v366, 2147483648
        %v410 = vor.u32 1.1754944e-38, %v409
        %v411 = vsel %vm408, %v410, %v406
        %v412 = vmul.f32 1.0, %v411
        %v413 = vrcp.pop %v367
        %v414 = vmul.f32 %v367, %v413
        %v415 = vsub.f32 1.0, %v414
        %v416 = vmul.f32 %v413, %v415
        %v417 = vadd.f32 %v413, %v416
        %vm418 = vweird.f32 %v367
        %vm419 = vweird.f32 %v413
        %vm420 = vmor %vm418, %vm419
        %v421 = vsel %vm420, %v413, %v417
        %v422 = vand.u32 2147483647, %v367
        %vm423 = vcmp.eq.f32.partialorder %v422, 8.507059e+37
        %v424 = vand.u32 %v367, 2147483648
        %v425 = vor.u32 1.1754944e-38, %v424
        %v426 = vsel %vm423, %v425, %v421
        %v427 = vmul.f32 1.0, %v426
        %s428 = smul.u32 %s228, 32
        %v429 = vlaneseq
        %v430 = vshrl.u32 %v429, 7
        %v431 = vadd.s32 %v430, 8
        %v432 = vadd.s32 %v430, 16
        %v433 = vadd.s32 %v430, 24
        %v434 = vstv %s428
        %v435 = vadd.s32 %v434, %v430
        %v436 = vadd.s32 %v434, %v431
        %v437 = vadd.s32 %v434, %v432
        %v438 = vadd.s32 %v434, %v433
        %vm439 = vcmp.lt.s32.totalorder %v435, 16
        %vm440 = vcmp.lt.s32.totalorder %v436, 16
        %vm441 = vcmp.lt.s32.totalorder %v437, 16
        %vm442 = vcmp.lt.s32.totalorder %v438, 16
        %v443 = vsel %vm439, %v382, 0.0
        %v444 = vsel %vm440, %v397, 0.0
        %v445 = vsel %vm441, %v412, 0.0
        %v446 = vsel %vm442, %v427, 0.0
        %v447 = vsel %vm439, %v348, 0.0
        %v448 = vsel %vm440, %v349, 0.0
        %v449 = vsel %vm441, %v350, 0.0
        %v450 = vsel %vm442, %v351, 0.0
        %v451 = vmul.f32 %v443, %v447
        %v452 = vmul.f32 %v444, %v448
        %v453 = vmul.f32 %v445, %v449
        %v454 = vmul.f32 %v446, %v450
        %v455 = vadd.f32 %v451, %v452
        %v456 = vadd.f32 %v455, %v453
        %v457 = vadd.f32 %v456, %v454
        %v458 = vadd.f32 %v443, %v447
        %v459 = vadd.f32 %v444, %v448
        %v460 = vadd.f32 %v445, %v449
        %v461 = vadd.f32 %v446, %v450
        %v462 = vadd.f32 %v458, %v459
        %v463 = vadd.f32 %v462, %v460
        %v464 = vadd.f32 %v463, %v461
        %v465 = vld [vmem:[%s221] sm:$0xff]
        %v466 = vadd.f32 %v465, %v457
        %467 = vst [vmem:[%s221] sm:$0xff] %v466
        %s468 = scalar_lea.vmem %s221, 8
        %v469 = vld [vmem:[%s468] sm:$0xff]
        %v470 = vadd.f32 %v469, %v464
        %471 = vst [vmem:[%s468] sm:$0xff] %v470
      $region40: #{soft_dice_loss.1} parent=27 // pred_fallthru
        _
      %p472 = scmp.lt.s32.totalorder %s17, 1
      %s473 = scalar_select %p472, %s17, 1
      %s474 = smul.addr %s473, 2
      %s475 = smul.addr %s474, 8
      %s476 = scalar_lea.vmem %s2, %s475
      // Predicated region
      $region41: #{soft_dice_loss.1} parent=27 // pred_check
        %p477 = pneg %p107
      $region42: #{soft_dice_loss.1} parent=27 // pred_check_branch
        %479 = sbr.rel (%p477) target = $region44
      $region43: #{soft_dice_loss.1} parent=27 // pred_region
        _
      $region44: #{soft_dice_loss.1} parent=27 // pred_fallthru
        _
    $region28: #{soft_dice_loss.1} parent=5 // pred_fallthru
      _
    %p480 = scmp.le.s32.totalorder 2, %s8
    // Predicated region
    $region45: #{soft_dice_loss.1} parent=5 // pred_check
      %p481 = pneg %p480
    $region46: #{soft_dice_loss.1} parent=5 // pred_check_branch
      %483 = sbr.rel (%p481) target = $region48
    $region47: #{soft_dice_loss.1} parent=5 // pred_region
      %s484 = ssub.s32 %s8, 2
      // Predicated region
      $region49: #{soft_dice_loss.1} parent=47 // pred_check
        %p485 = pneg %p113
      $region50: #{soft_dice_loss.1} parent=47 // pred_check_branch
        %487 = sbr.rel (%p485) target = $region52
      $region51: #{soft_dice_loss.1} parent=47 // pred_region
        %p488 = scmp.lt.s32.totalorder %s19, 1
        %s489 = scalar_select %p488, %s19, 1
        %s490 = smul.addr %s489, 2
        %s491 = smul.addr %s490, 8
        %s492 = scalar_lea.vmem %s2, %s491
      $region52: #{soft_dice_loss.1} parent=47 // pred_fallthru
        _
    $region48: #{soft_dice_loss.1} parent=5 // pred_fallthru
      _
  $region6: #{soft_dice_loss.1} parent=0 // loop_footer
    %s12 = sadd.s32 1, %s8
  $region7: #{soft_dice_loss.1} parent=0 // loop_footer_branch
    %7 = sbr.rel target = $region3
  $region8: #{soft_dice_loss.1} parent=0 // loop_exit
    _

</llo_original>
